<compile_context>
chip_gen: v7x
topology: tpu7x:2x2x1
jax: 0.10.0
libtpu: 0.0.40
codegen_flags: <defaults>
</compile_context>

<pallas_src>
import jax
import jax.numpy as jnp
from jax.experimental import pallas as pl
from jax.experimental.pallas import tpu as pltpu


def _make_scale_kernel(scale):
    """Elementwise scale kernel with the scale baked in as a constant."""
    def kernel(x_ref, o_ref):
        # Python-float scale is weakly typed: the multiply stays in x's dtype
        # (bf16 stays bf16); astype is a no-op when dtypes already match.
        o_ref[...] = (x_ref[...] * scale).astype(o_ref.dtype)
    return kernel


_MAX_WIDTH = 32768  # lanes; 32768 * 4B = 128 KiB per row for f32


def _pick_width(n):
    """Largest multiple of 128 that divides n (capped at _MAX_WIDTH)."""
    best = None
    w = 128
    while w <= _MAX_WIDTH:
        if n % w == 0:
            best = w
        w += 128
    return best


def unbalanced_weight_forward(x, eps, rho):
    """Computes (rho + eps/2) * x with a Pallas TPU kernel."""
    scale = float(rho) + float(eps) / 2.0
    orig_shape = x.shape
    dtype = x.dtype
    n = x.size

    x_flat = jnp.reshape(x, (-1,))

    # Choose a wide, lane-dense slab width that divides the element count.
    w = _pick_width(n)
    padded = False
    total = n
    if w is None:
        # Ragged element count (not a multiple of 128): pad to 128 lanes.
        # Costs one extra copy but only triggers for odd sizes.
        total = pl.cdiv(n, 128) * 128
        x_flat = jnp.pad(x_flat, (0, total - n))
        w = _pick_width(total)
        padded = True

    rows = total // w
    x2d = jnp.reshape(x_flat, (rows, w))

    # ~2 MiB blocks: big enough to amortize the ~0.35 us per-grid-step
    # overhead and sit near the HBM roofline, small enough that
    # double-buffered in+out fits every generation's default scoped VMEM.
    bytes_per_row = w * x2d.dtype.itemsize
    target_bytes = 2 * 1024 * 1024
    tr = max(1, target_bytes // bytes_per_row)
    tr = max(8, (tr // 8) * 8)          # keep sublane dim a multiple of 8
    if tr >= rows:
        tr = rows                        # full-extent block is always legal
    grid = (pl.cdiv(rows, tr),)          # partial last block is handled/masked

    out2d = pl.pallas_call(
        _make_scale_kernel(scale),
        out_shape=jax.ShapeDtypeStruct((rows, w), dtype),
        grid_spec=pltpu.PrefetchScalarGridSpec(
            num_scalar_prefetch=0,
            grid=grid,
            in_specs=[pl.BlockSpec((tr, w), lambda i: (i, 0))],
            out_specs=pl.BlockSpec((tr, w), lambda i: (i, 0)),
        ),
        compiler_params=pltpu.CompilerParams(
            dimension_semantics=("parallel",)),
    )(x2d)

    out_flat = jnp.reshape(out2d, (-1,))
    if padded:
        out_flat = out_flat[:n]
    return jnp.reshape(out_flat, orig_shape)


if __name__ == "__main__":
    eps = 0.1
    rho = 1.0

    key = jax.random.PRNGKey(0)
    # NCHW, same as the PyTorch module would see.
    x = jax.random.normal(key, (2, 4, 16, 16), dtype=jnp.float32)

    out = unbalanced_weight_forward(x, eps, rho)
    out = jax.block_until_ready(out)

    ref = (rho + eps / 2.0) * x
    assert out.shape == x.shape and out.dtype == x.dtype
    assert jnp.allclose(out, ref, rtol=1e-6, atol=1e-6)

    # Also exercise the ragged (non-multiple-of-128) fallback path.
    x_ragged = jax.random.normal(jax.random.PRNGKey(1), (3, 5, 7),
                                 dtype=jnp.float32)
    out_ragged = jax.block_until_ready(
        unbalanced_weight_forward(x_ragged, eps, rho))
    assert jnp.allclose(out_ragged, (rho + eps / 2.0) * x_ragged,
                        rtol=1e-6, atol=1e-6)

    # TODO(synk): the module's custom backward() ((rho + eps) * g) is not part
    # of the forward pass and is not implemented here.
    print("KERNEL_OK")
</pallas_src>

<mosaic_0001>
module attributes {stable_mosaic.version = 11 : i64} {
  func.func @kernel(%arg0: i32, %arg1: memref<1x2048xf32, #tpu.memory_space<vmem>>, %arg2: memref<1x2048xf32, #tpu.memory_space<vmem>>) attributes {dimension_semantics = [#tpu.dimension_semantics<parallel>], iteration_bounds = array<i64: 1>, scalar_prefetch = 0 : i64, scratch_operands = 0 : i64, tpu.core_type = #tpu.core_type<tc>, window_params = [{transform_indices = @transform_0, window_bounds = array<i64: 1, 2048>}, {transform_indices = @transform_1, window_bounds = array<i64: 1, 2048>}]} {
    %c0 = arith.constant 0 : index
    %c0_0 = arith.constant 0 : index
    %0 = vector.load %arg1[%c0, %c0_0] : memref<1x2048xf32, #tpu.memory_space<vmem>>, vector<1x2048xf32>
    %cst = arith.constant 1.050000e+00 : f32
    %1 = vector.broadcast %cst : f32 to vector<1x2048xf32>
    %2 = arith.mulf %0, %1 : vector<1x2048xf32>
    %c0_1 = arith.constant 0 : index
    %c0_2 = arith.constant 0 : index
    %3 = vector.load %arg2[%c0_1, %c0_2] : memref<1x2048xf32, #tpu.memory_space<vmem>>, vector<1x2048xf32>
    tpu.vector_store %arg2[%c0_1, %c0_2], %2 {strides = array<i32>} : memref<1x2048xf32, #tpu.memory_space<vmem>>, vector<1x2048xf32>,
    return
  }
  func.func @transform_0(%arg0: i32) -> (i32, i32) {
    %c0_i32 = arith.constant 0 : i32
    %c0_i32_0 = arith.constant 0 : i32
    return %arg0, %c0_i32 : i32, i32
  }
  func.func @transform_1(%arg0: i32) -> (i32, i32) {
    %c0_i32 = arith.constant 0 : i32
    %c0_i32_0 = arith.constant 0 : i32
    return %arg0, %c0_i32 : i32, i32
  }
}

</mosaic_0001>

<llo_original>
// kernel: tpu_custom_call.1
$region0: #{tpu_custom_call.1}
  #allocation0 [shape = 'u32[]', space=smem, size = 0x4, offset = 0x4, fixed_abs, tag = 'smem constant byte address 0x4 - core index']
  #allocation1 [shape = 'u32[144,128]{1,0:T(1,128)}', space=vmem, size = 0x12000, scoped, tag = 'internal scratch']
  %s0 = inlined_call_operand.hbm [shape: f32[1,2048], index: 0, kind: input, shape index: {}]
  %s1 = inlined_call_operand.hbm [shape: f32[1,2048], index: 1, kind: output, shape index: {}]
  %s2 = sld [smem:[#allocation0]]
  $region18: #{tpu_custom_call.1} parent=0
    _
  %s4 = ssub.s32 1, %s2
  %s5 = scalar_select 0, %s4, %s2
  $region1: #{tpu_custom_call.1} parent=0
    #allocation2 [shape = 'u8[8192]{0}', space=vmem, size = 0x2000, scoped, tag = 'input window, operand 0, single buffered']
    #allocation3 [shape = 's32[1]{0}', space=sflag, size = 0x4, scoped, tag = 'scoped memory for tpu_custom_call.1']
    #allocation4 [shape = 's32[1]{0}', space=sflag, size = 0x4, scoped, tag = 'scoped memory for tpu_custom_call.1']
    #allocation5 [shape = 'u8[8192]{0}', space=vmem, size = 0x2000, scoped, tag = 'output window, operand 0, single buffered']
    %6 = vsyncpa [#allocation3], 0
    %7 = vsyncpa [#allocation4], 0
    // Predicated region
    $region2: #{tpu_custom_call.1} parent=1 // pred_check
      _
    $region3: #{tpu_custom_call.1} parent=1 // pred_check_branch
      %9 = sbr.rel (0) target = $region5
    $region4: #{tpu_custom_call.1} parent=1 // pred_region
      %s11 = ssub.s32 256, 256
      %12 = vsyncadd [#allocation3], %s11
      %s14 = sshll.u32 [#allocation2], 4
      %s15 = int_to_ptr.vmem [resolvable:$true] %s14
      %17 = dma.hbm_to_vmem [thread:$0]  %s0, 256, %s15, [#allocation3]
    $region5: #{tpu_custom_call.1} parent=1 // pred_fallthru
      _
    // Predicated region
    $region6: #{tpu_custom_call.1} parent=1 // pred_check
      _
    $region7: #{tpu_custom_call.1} parent=1 // pred_check_branch
      %19 = sbr.rel (0) target = $region9
    $region8: #{tpu_custom_call.1} parent=1 // pred_region
      %20 = dma.done [#allocation3], 256
    $region9: #{tpu_custom_call.1} parent=1 // pred_fallthru
      _
    %v21 = vld [vmem:[#allocation2] sm:$0xff]
    %v22 = vld [vmem:[#allocation2 + $0x8] sm:$0xff]
    %v23 = vmul.f32 %v21, 1.05
    %v24 = vmul.f32 %v22, 1.05
    %25 = vst [vmem:[#allocation5] sm:$0xff] %v23
    %26 = vst [vmem:[#allocation5 + $0x8] sm:$0xff] %v24
    // Predicated region
    $region10: #{tpu_custom_call.1} parent=1 // pred_check
      _
    $region11: #{tpu_custom_call.1} parent=1 // pred_check_branch
      %28 = sbr.rel (0) target = $region13
    $region12: #{tpu_custom_call.1} parent=1 // pred_region
      %s30 = ssub.s32 256, 256
      %31 = vsyncadd [#allocation4], %s30
      %s33 = sshll.u32 [#allocation5], 4
      %s34 = int_to_ptr.vmem [resolvable:$true] %s33
      %36 = dma.vmem_to_hbm [thread:$0]  %s34, 256, %s1, [#allocation4]
    $region13: #{tpu_custom_call.1} parent=1 // pred_fallthru
      _
    // Predicated region
    $region14: #{tpu_custom_call.1} parent=1 // pred_check
      _
    $region15: #{tpu_custom_call.1} parent=1 // pred_check_branch
      %38 = sbr.rel (0) target = $region17
    $region16: #{tpu_custom_call.1} parent=1 // pred_region
      %39 = dma.done [#allocation4], 256
    $region17: #{tpu_custom_call.1} parent=1 // pred_fallthru
      _
    %40 = vsyncpa [#allocation3], 1
    %41 = vsyncpa [#allocation4], 1

</llo_original>
